<compile_context>
chip_gen: v7x
topology: tpu7x:2x2x1
jax: 0.10.0
libtpu: 0.0.40
codegen_flags: <defaults>
</compile_context>

<pallas_src>
import functools

import jax
import jax.numpy as jnp
from jax import lax
from jax.experimental import pallas as pl
from jax.experimental.pallas import tpu as pltpu


def bert_output_kernel(x_ref, w_ref, res_ref, p_ref, o_ref, acc_ref, *, eps):
    # x_ref  : [TM, TK]  row/K tile of FF activations (native dtype)
    # w_ref  : [TK, H]   pre-transposed dense weight tile (native dtype)
    # res_ref: [TM, H]   residual tile
    # p_ref  : [3,  H]   packed (bias, gamma, beta)
    # o_ref  : [TM, H]
    # acc_ref: [TM, H]   f32 accumulator scratch (persists across K steps)
    k = pl.program_id(1)

    @pl.when(k == 0)
    def _():
        acc_ref[...] = jnp.zeros_like(acc_ref)

    # Native-dtype MXU matmul, f32 accumulation.
    acc_ref[...] += jnp.dot(x_ref[...], w_ref[...],
                            preferred_element_type=jnp.float32)

    @pl.when(k == pl.num_programs(1) - 1)
    def _():
        p = p_ref[...].astype(jnp.float32)            # [3, H]
        y = acc_ref[...] + p[0]                       # + bias
        # dropout == identity at inference
        y = y + res_ref[...].astype(jnp.float32)      # + residual
        mean = jnp.mean(y, axis=-1, keepdims=True)
        c = y - mean
        var = jnp.mean(c * c, axis=-1, keepdims=True)
        inv = lax.rsqrt(var + eps)
        o_ref[...] = (c * inv * p[1] + p[2]).astype(o_ref.dtype)


def _row_tiling(m):
    """Pick (row_tile, padded_m): MXU-friendly, >= 2 grid steps when possible."""
    if m >= 1024:
        tm = 512
    elif m >= 512:
        tm = 256
    elif m >= 256:
        tm = 128
    elif m >= 16:
        tm = max(8, ((m // 2) // 8) * 8)      # >= 2 steps, sublane-aligned
    else:
        tm = ((m + 7) // 8) * 8               # tiny input: one padded step
    m_pad = ((m + tm - 1) // tm) * tm
    return tm, m_pad


def _k_tiling(i_dim):
    """Tile the contraction axis so x-tile + w-tile + accumulator stay small."""
    if i_dim <= 2048:
        return i_dim
    for cand in (2048, 1024, 512, 256, 128):
        if i_dim % cand == 0:
            return cand
    return i_dim


def _vmem_budget_bytes():
    cap = 128 * 1024 * 1024
    try:
        cap = int(pltpu.get_tpu_info().vmem_capacity_bytes)
    except Exception:
        pass
    # Headroom for compiler scratch: ~48 MiB on v7x (64 MiB VMEM),
    # ~100 MiB on v5e / v6e (128 MiB VMEM).
    return max(32 * 1024 * 1024, min(cap - 16 * 1024 * 1024, 100 * 1024 * 1024))


def bert_output(hidden_states, input_tensor, weight, bias, gamma, beta,
                *, eps=1e-12, row_tile=None):
    """hidden_states: [B,S,I], input_tensor: [B,S,H], weight: [H,I] (PyTorch)."""
    B, S, I = hidden_states.shape
    H = input_tensor.shape[-1]
    M = B * S

    x2 = hidden_states.reshape(M, I)
    r2 = input_tensor.reshape(M, H)
    w_t = jnp.transpose(weight)                      # [I, H]; one-time transpose
    params = jnp.stack([bias, gamma, beta], axis=0).reshape(3, H)

    if row_tile is not None:
        TM = int(row_tile)
        M_pad = ((M + TM - 1) // TM) * TM
    else:
        TM, M_pad = _row_tiling(M)
    if M_pad != M:
        pad = M_pad - M
        x2 = jnp.pad(x2, ((0, pad), (0, 0)))
        r2 = jnp.pad(r2, ((0, pad), (0, 0)))

    TK = _k_tiling(I)
    n_k = I // TK
    grid = (M_pad // TM, n_k)

    bytes_accessed = int(
        M_pad * I * jnp.dtype(hidden_states.dtype).itemsize        # x
        + I * H * jnp.dtype(weight.dtype).itemsize                 # W
        + M_pad * H * jnp.dtype(input_tensor.dtype).itemsize       # residual
        + M_pad * H * jnp.dtype(input_tensor.dtype).itemsize       # out
        + 3 * H * jnp.dtype(params.dtype).itemsize)                # params
    cost = pl.CostEstimate(flops=2 * M_pad * I * H,
                           transcendentals=M_pad,
                           bytes_accessed=bytes_accessed)

    def run(single_buffer_constants):
        def const_spec(block_shape, index_map):
            if single_buffer_constants:
                return pl.BlockSpec(block_shape, index_map,
                                    pipeline_mode=pl.Buffered(1))
            return pl.BlockSpec(block_shape, index_map)

        if n_k == 1:
            w_spec = const_spec((TK, H), lambda i, k: (0, 0))
        else:
            w_spec = pl.BlockSpec((TK, H), lambda i, k: (k, 0))
        p_spec = const_spec((3, H), lambda i, k: (0, 0))

        return pl.pallas_call(
            functools.partial(bert_output_kernel, eps=eps),
            out_shape=jax.ShapeDtypeStruct((M_pad, H), input_tensor.dtype),
            grid_spec=pltpu.PrefetchScalarGridSpec(
                num_scalar_prefetch=0,
                grid=grid,
                in_specs=[
                    pl.BlockSpec((TM, TK), lambda i, k: (i, k)),   # x tile
                    w_spec,                                        # weight tile
                    pl.BlockSpec((TM, H), lambda i, k: (i, 0)),    # residual tile
                    p_spec,                                        # bias/gamma/beta
                ],
                out_specs=pl.BlockSpec((TM, H), lambda i, k: (i, 0)),
                scratch_shapes=[pltpu.VMEM((TM, H), jnp.float32)],
            ),
            compiler_params=pltpu.CompilerParams(
                dimension_semantics=("parallel", "arbitrary"),
                vmem_limit_bytes=_vmem_budget_bytes(),
            ),
            cost_estimate=cost,
        )(x2, w_t, r2, params)

    try:
        out = run(True)
    except Exception:
        # Fallback if single-buffered (Buffered(1)) constants are unsupported.
        out = run(False)

    return out[:M].reshape(B, S, H)


if __name__ == "__main__":
    # Small shapes consistent with BertOutput: hidden=32, intermediate=4*hidden.
    B, S, H = 2, 8, 32
    I = 4 * H
    eps = 1e-12

    key = jax.random.PRNGKey(0)
    k_x, k_r, k_w, k_b, k_g, k_be = jax.random.split(key, 6)

    hidden_states = jax.random.normal(k_x, (B, S, I), dtype=jnp.float32)
    input_tensor = jax.random.normal(k_r, (B, S, H), dtype=jnp.float32)
    weight = jax.random.normal(k_w, (H, I), dtype=jnp.float32) * 0.02   # [out, in]
    bias = jax.random.normal(k_b, (H,), dtype=jnp.float32) * 0.02
    gamma = 1.0 + jax.random.normal(k_g, (H,), dtype=jnp.float32) * 0.02
    beta = jax.random.normal(k_be, (H,), dtype=jnp.float32) * 0.02

    out = bert_output(hidden_states, input_tensor, weight, bias, gamma, beta,
                      eps=eps)
    out = jax.block_until_ready(out)

    # Pure-JAX reference (dropout is identity in eval mode).
    y = hidden_states.reshape(B * S, I) @ weight.T + bias
    y = y + input_tensor.reshape(B * S, H)
    mean = y.mean(axis=-1, keepdims=True)
    var = ((y - mean) ** 2).mean(axis=-1, keepdims=True)
    ref = ((y - mean) / jnp.sqrt(var + eps)) * gamma + beta
    ref = ref.reshape(B, S, H)

    assert out.shape == (B, S, H)
    assert jnp.allclose(out, ref, atol=1e-4, rtol=1e-4), "mismatch vs reference"
    print("KERNEL_OK")
</pallas_src>

<mosaic_0001>
module attributes {stable_mosaic.version = 11 : i64} {
  func.func @bert_output_kernel(%arg0: i32, %arg1: i32, %arg2: memref<8x128xf32, #tpu.memory_space<vmem>>, %arg3: memref<128x32xf32, #tpu.memory_space<vmem>>, %arg4: memref<8x32xf32, #tpu.memory_space<vmem>>, %arg5: memref<3x32xf32, #tpu.memory_space<vmem>>, %arg6: memref<8x32xf32, #tpu.memory_space<vmem>>, %arg7: memref<8x32xf32, #tpu.memory_space<vmem>>) attributes {dimension_semantics = [#tpu.dimension_semantics<parallel>, #tpu.dimension_semantics<arbitrary>], iteration_bounds = array<i64: 2, 1>, scalar_prefetch = 0 : i64, scratch_operands = 1 : i64, tpu.core_type = #tpu.core_type<tc>, window_params = [{transform_indices = @transform_0, window_bounds = array<i64: 8, 128>}, {pipeline_mode = #tpu.pipeline_mode<synchronous>, transform_indices = @transform_1, window_bounds = array<i64: 128, 32>}, {transform_indices = @transform_2, window_bounds = array<i64: 8, 32>}, {pipeline_mode = #tpu.pipeline_mode<synchronous>, transform_indices = @transform_3, window_bounds = array<i64: 3, 32>}, {transform_indices = @transform_4, window_bounds = array<i64: 8, 32>}]} {
    %c0_i32 = arith.constant 0 : i32
    %0 = arith.cmpi eq, %arg1, %c0_i32 : i32
    %1 = arith.extui %0 : i1 to i32
    %c0_i32_0 = arith.constant 0 : i32
    %2 = arith.cmpi ne, %1, %c0_i32_0 : i32
    scf.if %2 {
      %cst_10 = arith.constant 0.000000e+00 : f32
      %12 = vector.broadcast %cst_10 : f32 to vector<8x32xf32>
      %c0_11 = arith.constant 0 : index
      %c0_12 = arith.constant 0 : index
      %13 = vector.load %arg7[%c0_11, %c0_12] : memref<8x32xf32, #tpu.memory_space<vmem>>, vector<8x32xf32>
      tpu.vector_store %arg7[%c0_11, %c0_12], %12 {strides = array<i32>} : memref<8x32xf32, #tpu.memory_space<vmem>>, vector<8x32xf32>,
    } else {
    }
    %c0 = arith.constant 0 : index
    %c0_1 = arith.constant 0 : index
    %3 = vector.load %arg7[%c0, %c0_1] : memref<8x32xf32, #tpu.memory_space<vmem>>, vector<8x32xf32>
    %c0_2 = arith.constant 0 : index
    %c0_3 = arith.constant 0 : index
    %4 = vector.load %arg2[%c0_2, %c0_3] : memref<8x128xf32, #tpu.memory_space<vmem>>, vector<8x128xf32>
    %c0_4 = arith.constant 0 : index
    %c0_5 = arith.constant 0 : index
    %5 = vector.load %arg3[%c0_4, %c0_5] : memref<128x32xf32, #tpu.memory_space<vmem>>, vector<128x32xf32>
    %cst = arith.constant dense<0.000000e+00> : vector<8x32xf32>
    %6 = tpu.matmul %4, %5, %cst {dimension_numbers = #tpu.dot_dimension_numbers<[1], [0], [0], [1], [0, 0, 1, 1], [], []>} : vector<8x128xf32>, vector<128x32xf32>, vector<8x32xf32> -> vector<8x32xf32>
    %7 = arith.addf %3, %6 : vector<8x32xf32>
    %c0_6 = arith.constant 0 : index
    %c0_7 = arith.constant 0 : index
    %8 = vector.load %arg7[%c0_6, %c0_7] : memref<8x32xf32, #tpu.memory_space<vmem>>, vector<8x32xf32>
    tpu.vector_store %arg7[%c0_6, %c0_7], %7 {strides = array<i32>} : memref<8x32xf32, #tpu.memory_space<vmem>>, vector<8x32xf32>,
    %c0_i32_8 = arith.constant 0 : i32
    %9 = arith.cmpi eq, %arg1, %c0_i32_8 : i32
    %10 = arith.extui %9 : i1 to i32
    %c0_i32_9 = arith.constant 0 : i32
    %11 = arith.cmpi ne, %10, %c0_i32_9 : i32
    scf.if %11 {
      %c0_10 = arith.constant 0 : index
      %c0_11 = arith.constant 0 : index
      %12 = vector.load %arg5[%c0_10, %c0_11] : memref<3x32xf32, #tpu.memory_space<vmem>>, vector<3x32xf32>
      %c0_12 = arith.constant 0 : index
      %c0_13 = arith.constant 0 : index
      %13 = vector.load %arg7[%c0_12, %c0_13] : memref<8x32xf32, #tpu.memory_space<vmem>>, vector<8x32xf32>
      %14 = vector.extract_strided_slice %12 {offsets = [0, 0], sizes = [1, 32], strides = [1, 1]} : vector<3x32xf32> to vector<1x32xf32>
      %15 = vector.shape_cast %14 : vector<1x32xf32> to vector<32xf32>
      %16 = vector.shape_cast %15 : vector<32xf32> to vector<1x32xf32>
      %17 = vector.broadcast %16 : vector<1x32xf32> to vector<8x32xf32>
      %18 = arith.addf %13, %17 : vector<8x32xf32>
      %c0_14 = arith.constant 0 : index
      %c0_15 = arith.constant 0 : index
      %19 = vector.load %arg4[%c0_14, %c0_15] : memref<8x32xf32, #tpu.memory_space<vmem>>, vector<8x32xf32>
      %20 = arith.addf %18, %19 : vector<8x32xf32>
      %cst_16 = arith.constant dense<0.000000e+00> : vector<8xf32>
      %21 = vector.multi_reduction <add>, %20, %cst_16 [1] : vector<8x32xf32> to vector<8xf32>
      %22 = vector.shape_cast %21 : vector<8xf32> to vector<8x1xf32>
      %cst_17 = arith.constant 3.200000e+01 : f32
      %23 = vector.broadcast %cst_17 : f32 to vector<8x1xf32>
      %24 = arith.divf %22, %23 : vector<8x1xf32>
      %25 = vector.broadcast %24 : vector<8x1xf32> to vector<8x32xf32>
      %26 = arith.subf %20, %25 : vector<8x32xf32>
      %27 = arith.mulf %26, %26 : vector<8x32xf32>
      %cst_18 = arith.constant dense<0.000000e+00> : vector<8xf32>
      %28 = vector.multi_reduction <add>, %27, %cst_18 [1] : vector<8x32xf32> to vector<8xf32>
      %29 = vector.shape_cast %28 : vector<8xf32> to vector<8x1xf32>
      %cst_19 = arith.constant 3.200000e+01 : f32
      %30 = vector.broadcast %cst_19 : f32 to vector<8x1xf32>
      %31 = arith.divf %29, %30 : vector<8x1xf32>
      %cst_20 = arith.constant 9.99999996E-13 : f32
      %32 = vector.broadcast %cst_20 : f32 to vector<8x1xf32>
      %33 = arith.addf %31, %32 : vector<8x1xf32>
      %34 = math.rsqrt %33 : vector<8x1xf32>
      %35 = vector.broadcast %34 : vector<8x1xf32> to vector<8x32xf32>
      %36 = arith.mulf %26, %35 : vector<8x32xf32>
      %37 = vector.extract_strided_slice %12 {offsets = [1, 0], sizes = [1, 32], strides = [1, 1]} : vector<3x32xf32> to vector<1x32xf32>
      %38 = vector.shape_cast %37 : vector<1x32xf32> to vector<32xf32>
      %39 = vector.shape_cast %38 : vector<32xf32> to vector<1x32xf32>
      %40 = vector.broadcast %39 : vector<1x32xf32> to vector<8x32xf32>
      %41 = arith.mulf %36, %40 : vector<8x32xf32>
      %42 = vector.extract_strided_slice %12 {offsets = [2, 0], sizes = [1, 32], strides = [1, 1]} : vector<3x32xf32> to vector<1x32xf32>
      %43 = vector.shape_cast %42 : vector<1x32xf32> to vector<32xf32>
      %44 = vector.shape_cast %43 : vector<32xf32> to vector<1x32xf32>
      %45 = vector.broadcast %44 : vector<1x32xf32> to vector<8x32xf32>
      %46 = arith.addf %41, %45 : vector<8x32xf32>
      %c0_21 = arith.constant 0 : index
      %c0_22 = arith.constant 0 : index
      %47 = vector.load %arg6[%c0_21, %c0_22] : memref<8x32xf32, #tpu.memory_space<vmem>>, vector<8x32xf32>
      tpu.vector_store %arg6[%c0_21, %c0_22], %46 {strides = array<i32>} : memref<8x32xf32, #tpu.memory_space<vmem>>, vector<8x32xf32>,
    } else {
    }
    return
  }
  func.func @transform_0(%arg0: i32, %arg1: i32) -> (i32, i32) {
    %c0_i32 = arith.constant 0 : i32
    return %arg0, %arg1 : i32, i32
  }
  func.func @transform_1(%arg0: i32, %arg1: i32) -> (i32, i32) {
    %c0_i32 = arith.constant 0 : i32
    %c0_i32_0 = arith.constant 0 : i32
    %c0_i32_1 = arith.constant 0 : i32
    return %c0_i32, %c0_i32_0 : i32, i32
  }
  func.func @transform_2(%arg0: i32, %arg1: i32) -> (i32, i32) {
    %c0_i32 = arith.constant 0 : i32
    %c0_i32_0 = arith.constant 0 : i32
    return %arg0, %c0_i32 : i32, i32
  }
  func.func @transform_3(%arg0: i32, %arg1: i32) -> (i32, i32) {
    %c0_i32 = arith.constant 0 : i32
    %c0_i32_0 = arith.constant 0 : i32
    %c0_i32_1 = arith.constant 0 : i32
    return %c0_i32, %c0_i32_0 : i32, i32
  }
  func.func @transform_4(%arg0: i32, %arg1: i32) -> (i32, i32) {
    %c0_i32 = arith.constant 0 : i32
    %c0_i32_0 = arith.constant 0 : i32
    return %arg0, %c0_i32 : i32, i32
  }
}

module attributes {stable_mosaic.version = 11 : i64} {
  func.func @bert_output_kernel(%arg0: i32, %arg1: i32, %arg2: memref<8x128xf32, #tpu.memory_space<vmem>>, %arg3: memref<128x32xf32, #tpu.memory_space<vmem>>, %arg4: memref<8x32xf32, #tpu.memory_space<vmem>>, %arg5: memref<3x32xf32, #tpu.memory_space<vmem>>, %arg6: memref<8x32xf32, #tpu.memory_space<vmem>>, %arg7: memref<8x32xf32, #tpu.memory_space<vmem>>) attributes {dimension_semantics = [#tpu.dimension_semantics<parallel>, #tpu.dimension_semantics<arbitrary>], iteration_bounds = array<i64: 2, 1>, scalar_prefetch = 0 : i64, scratch_operands = 1 : i64, tpu.core_type = #tpu.core_type<tc>, window_params = [{transform_indices = @transform_0, window_bounds = array<i64: 8, 128>}, {pipeline_mode = #tpu.pipeline_mode<synchronous>, transform_indices = @transform_1, window_bounds = array<i64: 128, 32>}, {transform_indices = @transform_2, window_bounds = array<i64: 8, 32>}, {pipeline_mode = #tpu.pipeline_mode<synchronous>, transform_indices = @transform_3, window_bounds = array<i64: 3, 32>}, {transform_indices = @transform_4, window_bounds = array<i64: 8, 32>}]} {
    %c0_i32 = arith.constant 0 : i32
    %0 = arith.cmpi eq, %arg1, %c0_i32 : i32
    %1 = arith.extui %0 : i1 to i32
    %c0_i32_0 = arith.constant 0 : i32
    %2 = arith.cmpi ne, %1, %c0_i32_0 : i32
    scf.if %2 {
      %cst_10 = arith.constant 0.000000e+00 : f32
      %12 = vector.broadcast %cst_10 : f32 to vector<8x32xf32>
      %c0_11 = arith.constant 0 : index
      %c0_12 = arith.constant 0 : index
      %13 = vector.load %arg7[%c0_11, %c0_12] : memref<8x32xf32, #tpu.memory_space<vmem>>, vector<8x32xf32>
      tpu.vector_store %arg7[%c0_11, %c0_12], %12 {strides = array<i32>} : memref<8x32xf32, #tpu.memory_space<vmem>>, vector<8x32xf32>,
    } else {
    }
    %c0 = arith.constant 0 : index
    %c0_1 = arith.constant 0 : index
    %3 = vector.load %arg7[%c0, %c0_1] : memref<8x32xf32, #tpu.memory_space<vmem>>, vector<8x32xf32>
    %c0_2 = arith.constant 0 : index
    %c0_3 = arith.constant 0 : index
    %4 = vector.load %arg2[%c0_2, %c0_3] : memref<8x128xf32, #tpu.memory_space<vmem>>, vector<8x128xf32>
    %c0_4 = arith.constant 0 : index
    %c0_5 = arith.constant 0 : index
    %5 = vector.load %arg3[%c0_4, %c0_5] : memref<128x32xf32, #tpu.memory_space<vmem>>, vector<128x32xf32>
    %cst = arith.constant dense<0.000000e+00> : vector<8x32xf32>
    %6 = tpu.matmul %4, %5, %cst {dimension_numbers = #tpu.dot_dimension_numbers<[1], [0], [0], [1], [0, 0, 1, 1], [], []>} : vector<8x128xf32>, vector<128x32xf32>, vector<8x32xf32> -> vector<8x32xf32>
    %7 = arith.addf %3, %6 : vector<8x32xf32>
    %c0_6 = arith.constant 0 : index
    %c0_7 = arith.constant 0 : index
    %8 = vector.load %arg7[%c0_6, %c0_7] : memref<8x32xf32, #tpu.memory_space<vmem>>, vector<8x32xf32>
    tpu.vector_store %arg7[%c0_6, %c0_7], %7 {strides = array<i32>} : memref<8x32xf32, #tpu.memory_space<vmem>>, vector<8x32xf32>,
    %c0_i32_8 = arith.constant 0 : i32
    %9 = arith.cmpi eq, %arg1, %c0_i32_8 : i32
    %10 = arith.extui %9 : i1 to i32
    %c0_i32_9 = arith.constant 0 : i32
    %11 = arith.cmpi ne, %10, %c0_i32_9 : i32
    scf.if %11 {
      %c0_10 = arith.constant 0 : index
      %c0_11 = arith.constant 0 : index
      %12 = vector.load %arg5[%c0_10, %c0_11] : memref<3x32xf32, #tpu.memory_space<vmem>>, vector<3x32xf32>
      %c0_12 = arith.constant 0 : index
      %c0_13 = arith.constant 0 : index
      %13 = vector.load %arg7[%c0_12, %c0_13] : memref<8x32xf32, #tpu.memory_space<vmem>>, vector<8x32xf32>
      %14 = vector.extract_strided_slice %12 {offsets = [0, 0], sizes = [1, 32], strides = [1, 1]} : vector<3x32xf32> to vector<1x32xf32>
      %15 = vector.shape_cast %14 : vector<1x32xf32> to vector<32xf32>
      %16 = vector.shape_cast %15 : vector<32xf32> to vector<1x32xf32>
      %17 = vector.broadcast %16 : vector<1x32xf32> to vector<8x32xf32>
      %18 = arith.addf %13, %17 : vector<8x32xf32>
      %c0_14 = arith.constant 0 : index
      %c0_15 = arith.constant 0 : index
      %19 = vector.load %arg4[%c0_14, %c0_15] : memref<8x32xf32, #tpu.memory_space<vmem>>, vector<8x32xf32>
      %20 = arith.addf %18, %19 : vector<8x32xf32>
      %cst_16 = arith.constant dense<0.000000e+00> : vector<8xf32>
      %21 = vector.multi_reduction <add>, %20, %cst_16 [1] : vector<8x32xf32> to vector<8xf32>
      %22 = vector.shape_cast %21 : vector<8xf32> to vector<8x1xf32>
      %cst_17 = arith.constant 3.200000e+01 : f32
      %23 = vector.broadcast %cst_17 : f32 to vector<8x1xf32>
      %24 = arith.divf %22, %23 : vector<8x1xf32>
      %25 = vector.broadcast %24 : vector<8x1xf32> to vector<8x32xf32>
      %26 = arith.subf %20, %25 : vector<8x32xf32>
      %27 = arith.mulf %26, %26 : vector<8x32xf32>
      %cst_18 = arith.constant dense<0.000000e+00> : vector<8xf32>
      %28 = vector.multi_reduction <add>, %27, %cst_18 [1] : vector<8x32xf32> to vector<8xf32>
      %29 = vector.shape_cast %28 : vector<8xf32> to vector<8x1xf32>
      %cst_19 = arith.constant 3.200000e+01 : f32
      %30 = vector.broadcast %cst_19 : f32 to vector<8x1xf32>
      %31 = arith.divf %29, %30 : vector<8x1xf32>
      %cst_20 = arith.constant 9.99999996E-13 : f32
      %32 = vector.broadcast %cst_20 : f32 to vector<8x1xf32>
      %33 = arith.addf %31, %32 : vector<8x1xf32>
      %34 = math.rsqrt %33 : vector<8x1xf32>
      %35 = vector.broadcast %34 : vector<8x1xf32> to vector<8x32xf32>
      %36 = arith.mulf %26, %35 : vector<8x32xf32>
      %37 = vector.extract_strided_slice %12 {offsets = [1, 0], sizes = [1, 32], strides = [1, 1]} : vector<3x32xf32> to vector<1x32xf32>
      %38 = vector.shape_cast %37 : vector<1x32xf32> to vector<32xf32>
      %39 = vector.shape_cast %38 : vector<32xf32> to vector<1x32xf32>
      %40 = vector.broadcast %39 : vector<1x32xf32> to vector<8x32xf32>
      %41 = arith.mulf %36, %40 : vector<8x32xf32>
      %42 = vector.extract_strided_slice %12 {offsets = [2, 0], sizes = [1, 32], strides = [1, 1]} : vector<3x32xf32> to vector<1x32xf32>
      %43 = vector.shape_cast %42 : vector<1x32xf32> to vector<32xf32>
      %44 = vector.shape_cast %43 : vector<32xf32> to vector<1x32xf32>
      %45 = vector.broadcast %44 : vector<1x32xf32> to vector<8x32xf32>
      %46 = arith.addf %41, %45 : vector<8x32xf32>
      %c0_21 = arith.constant 0 : index
      %c0_22 = arith.constant 0 : index
      %47 = vector.load %arg6[%c0_21, %c0_22] : memref<8x32xf32, #tpu.memory_space<vmem>>, vector<8x32xf32>
      tpu.vector_store %arg6[%c0_21, %c0_22], %46 {strides = array<i32>} : memref<8x32xf32, #tpu.memory_space<vmem>>, vector<8x32xf32>,
    } else {
    }
    return
  }
  func.func @transform_0(%arg0: i32, %arg1: i32) -> (i32, i32) {
    %c0_i32 = arith.constant 0 : i32
    return %arg0, %arg1 : i32, i32
  }
  func.func @transform_1(%arg0: i32, %arg1: i32) -> (i32, i32) {
    %c0_i32 = arith.constant 0 : i32
    %c0_i32_0 = arith.constant 0 : i32
    %c0_i32_1 = arith.constant 0 : i32
    return %c0_i32, %c0_i32_0 : i32, i32
  }
  func.func @transform_2(%arg0: i32, %arg1: i32) -> (i32, i32) {
    %c0_i32 = arith.constant 0 : i32
    %c0_i32_0 = arith.constant 0 : i32
    return %arg0, %c0_i32 : i32, i32
  }
  func.func @transform_3(%arg0: i32, %arg1: i32) -> (i32, i32) {
    %c0_i32 = arith.constant 0 : i32
    %c0_i32_0 = arith.constant 0 : i32
    %c0_i32_1 = arith.constant 0 : i32
    return %c0_i32, %c0_i32_0 : i32, i32
  }
  func.func @transform_4(%arg0: i32, %arg1: i32) -> (i32, i32) {
    %c0_i32 = arith.constant 0 : i32
    %c0_i32_0 = arith.constant 0 : i32
    return %arg0, %c0_i32 : i32, i32
  }
}

</mosaic_0001>

<llo_original>
// kernel: tpu_custom_call.1
$region0: #{tpu_custom_call.1}
  #allocation0 [shape = 'u32[]', space=smem, size = 0x4, offset = 0x4, fixed_abs, tag = 'smem constant byte address 0x4 - core index']
  #allocation1 [shape = 'u32[144,128]{1,0:T(1,128)}', space=vmem, size = 0x12000, scoped, tag = 'internal scratch']
  #allocation2 [shape = 'f32[8,32]{1,0:T(8,128)}', space=vmem, size = 0x1000, scoped, tag = 'scratch operand']
  %s0 = inlined_call_operand.hbm [shape: f32[16,128], index: 0, kind: input, shape index: {}]
  %s1 = inlined_call_operand.hbm [shape: f32[128,32], index: 1, kind: input, shape index: {}]
  %s2 = inlined_call_operand.hbm [shape: f32[16,32], index: 2, kind: input, shape index: {}]
  %s3 = inlined_call_operand.hbm [shape: f32[3,32], index: 3, kind: input, shape index: {}]
  %s4 = inlined_call_operand.hbm [shape: f32[16,32], index: 4, kind: output, shape index: {}]
  %s5 = sld [smem:[#allocation0]]
  $region73: #{tpu_custom_call.1} parent=0
    _
  %s7 = ssub.s32 1, %s5
  %s8 = scalar_select 0, %s7, %s5
  $region1: #{tpu_custom_call.1} parent=0
    #allocation3 [shape = 'u8[8192]{0}', space=vmem, size = 0x2000, scoped, tag = 'input window, operand 0']
    #allocation4 [shape = 's32[2]{0}', space=sflag, size = 0x8, scoped, tag = 'scoped memory for tpu_custom_call.1']
    #allocation5 [shape = 's32[2]{0}', space=sflag, size = 0x8, scoped, tag = 'scoped memory for tpu_custom_call.1']
    #allocation6 [shape = 'u8[65536]{0}', space=vmem, size = 0x10000, scoped, tag = 'input window, operand 1, single buffered']
    #allocation7 [shape = 's32[1]{0}', space=sflag, size = 0x4, scoped, tag = 'scoped memory for tpu_custom_call.1']
    #allocation8 [shape = 'u8[8192]{0}', space=vmem, size = 0x2000, scoped, tag = 'input window, operand 2']
    #allocation9 [shape = 'u8[2048]{0}', space=vmem, size = 0x800, scoped, tag = 'input window, operand 3, single buffered']
    #allocation10 [shape = 'u8[8192]{0}', space=vmem, size = 0x2000, scoped, tag = 'output window, operand 0']
    %9 = vsyncpa [#allocation4], 0
    %s10 = scalar_lea.sflag [#allocation4], 1
    %11 = vsyncpa %s10, 0
    %12 = vsyncpa [#allocation7], 0
    %13 = vsyncpa [#allocation5], 0
    %s14 = scalar_lea.sflag [#allocation5], 1
    %15 = vsyncpa %s14, 0
    loop: start=0, step=1, limit=4
    $region2: #{tpu_custom_call.1} parent=1 // loop_pre_header
      _
    $region3: #{tpu_custom_call.1} parent=1 // loop_header
      %s17 = sphi 0, %s21
      %p18 = scmp.ge.s32.totalorder %s17, 4
      %s24 = sphi 0, %s36
      %s25 = sphi 0, %s32
      %s26 = sphi 0, %s24
      %s27 = sphi 0, %s25
      %s28 = sphi 0, %s26
      %s29 = sphi 0, %s27
      %s41 = sphi 0, %s43
      %s44 = sphi 0, %s41
      %s45 = sphi 0, %s44
      %s61 = sphi 0, %s45
      %s65 = sphi 0, %s65
      %s67 = sphi 0, %s65
      %s68 = sphi 0, %s67
      %s82 = sphi 0, %s68
      %s88 = sphi 0, %s90
      %s91 = sphi 0, %s88
      %s92 = sphi 0, %s91
      %s108 = sphi 0, %s92
      %s112 = sphi 0, %s112
      %s114 = sphi 0, %s112
      %s115 = sphi 0, %s114
      %s129 = sphi 0, %s115
      %s135 = sphi 0, %s137
      %s138 = sphi 0, %s135
      %s139 = sphi 0, %s138
      %s155 = sphi 0, %s139
    $region4: #{tpu_custom_call.1} parent=1 // loop_header_branch
      %20 = sbr.rel (%p18) target = $region8
    $region5: #{tpu_custom_call.1} parent=1 // loop_body
      %s22 = ssub.s32 %s17, 1
      %s23 = ssub.s32 %s17, 2
      %s30 = sadd.s32 1, %s25
      %p31 = scmp.ge.s32.totalorder %s30, 1
      %s32 = scalar_select %p31, 0, %s30
      %s33 = sadd.s32 1, %s24
      %s34 = scalar_select %p31, %s33, %s24
      %p35 = scmp.ge.s32.totalorder %s34, 2
      %s36 = scalar_select %p35, 0, %s34
      %s37 = ssub.s32 %s24, %s36
      %s38 = ssub.s32 %s25, %s32
      %s39 = sor.u32 %s37, %s38
      %p40 = scmp.eq.s32.totalorder %s39, 0
      %s42 = sadd.s32 %s41, 1
      %s43 = scalar_select %p40, %s41, %s42
      %p46 = pneg %p40
      %p47 = scmp.eq.s32.totalorder %s17, 1
      %p48 = por %p46, %p47
      %p49 = scmp.ne.s32.totalorder %s41, %s44
      %p50 = scmp.eq.s32.totalorder %s17, 0
      %p51 = por %p49, %p50
      %p52 = scmp.ne.s32.totalorder %s41, %s44
      %p53 = scmp.eq.s32.totalorder %s22, 1
      %p54 = por %p52, %p53
      %p55 = scmp.ne.s32.totalorder %s44, %s45
      %p56 = scmp.eq.s32.totalorder %s22, 0
      %p57 = por %p55, %p56
      %p58 = scmp.ne.s32.totalorder %s44, %s45
      %p59 = scmp.eq.s32.totalorder %s23, 1
      %p60 = por %p58, %p59
      %p62 = scmp.ne.s32.totalorder %s45, %s61
      %p63 = scmp.eq.s32.totalorder %s23, 0
      %p64 = por %p62, %p63
      %s66 = sadd.s32 %s65, 1
      %p69 = scmp.eq.s32.totalorder %s17, 1
      %p70 = scmp.ne.s32.totalorder %s65, %s67
      %p71 = scmp.eq.s32.totalorder %s17, 0
      %p72 = por %p70, %p71
      %p73 = scmp.ne.s32.totalorder %s65, %s67
      %p74 = scmp.eq.s32.totalorder %s22, 1
      %p75 = por %p73, %p74
      %p76 = scmp.ne.s32.totalorder %s67, %s68
      %p77 = scmp.eq.s32.totalorder %s22, 0
      %p78 = por %p76, %p77
      %p79 = scmp.ne.s32.totalorder %s67, %s68
      %p80 = scmp.eq.s32.totalorder %s23, 1
      %p81 = por %p79, %p80
      %p83 = scmp.ne.s32.totalorder %s68, %s82
      %p84 = scmp.eq.s32.totalorder %s23, 0
      %p85 = por %p83, %p84
      %s86 = ssub.s32 %s24, %s36
      %p87 = scmp.eq.s32.totalorder %s86, 0
      %s89 = sadd.s32 %s88, 1
      %s90 = scalar_select %p87, %s88, %s89
      %p93 = pneg %p87
      %p94 = scmp.eq.s32.totalorder %s17, 1
      %p95 = por %p93, %p94
      %p96 = scmp.ne.s32.totalorder %s88, %s91
      %p97 = scmp.eq.s32.totalorder %s17, 0
      %p98 = por %p96, %p97
      %p99 = scmp.ne.s32.totalorder %s88, %s91
      %p100 = scmp.eq.s32.totalorder %s22, 1
      %p101 = por %p99, %p100
      %p102 = scmp.ne.s32.totalorder %s91, %s92
      %p103 = scmp.eq.s32.totalorder %s22, 0
      %p104 = por %p102, %p103
      %p105 = scmp.ne.s32.totalorder %s91, %s92
      %p106 = scmp.eq.s32.totalorder %s23, 1
      %p107 = por %p105, %p106
      %p109 = scmp.ne.s32.totalorder %s92, %s108
      %p110 = scmp.eq.s32.totalorder %s23, 0
      %p111 = por %p109, %p110
      %s113 = sadd.s32 %s112, 1
      %p116 = scmp.eq.s32.totalorder %s17, 1
      %p117 = scmp.ne.s32.totalorder %s112, %s114
      %p118 = scmp.eq.s32.totalorder %s17, 0
      %p119 = por %p117, %p118
      %p120 = scmp.ne.s32.totalorder %s112, %s114
      %p121 = scmp.eq.s32.totalorder %s22, 1
      %p122 = por %p120, %p121
      %p123 = scmp.ne.s32.totalorder %s114, %s115
      %p124 = scmp.eq.s32.totalorder %s22, 0
      %p125 = por %p123, %p124
      %p126 = scmp.ne.s32.totalorder %s114, %s115
      %p127 = scmp.eq.s32.totalorder %s23, 1
      %p128 = por %p126, %p127
      %p130 = scmp.ne.s32.totalorder %s115, %s129
      %p131 = scmp.eq.s32.totalorder %s23, 0
      %p132 = por %p130, %p131
      %s133 = ssub.s32 %s24, %s36
      %p134 = scmp.eq.s32.totalorder %s133, 0
      %s136 = sadd.s32 %s135, 1
      %s137 = scalar_select %p134, %s135, %s136
      %p140 = pneg %p134
      %p141 = scmp.eq.s32.totalorder %s17, 1
      %p142 = por %p140, %p141
      %p143 = scmp.ne.s32.totalorder %s135, %s138
      %p144 = scmp.eq.s32.totalorder %s17, 0
      %p145 = por %p143, %p144
      %p146 = scmp.ne.s32.totalorder %s135, %s138
      %p147 = scmp.eq.s32.totalorder %s22, 1
      %p148 = por %p146, %p147
      %p149 = scmp.ne.s32.totalorder %s138, %s139
      %p150 = scmp.eq.s32.totalorder %s22, 0
      %p151 = por %p149, %p150
      %p152 = scmp.ne.s32.totalorder %s138, %s139
      %p153 = scmp.eq.s32.totalorder %s23, 1
      %p154 = por %p152, %p153
      %p156 = scmp.ne.s32.totalorder %s139, %s155
      %p157 = scmp.eq.s32.totalorder %s23, 0
      %p158 = por %p156, %p157
      %p159 = scmp.le.s32.totalorder 1, %s17
      %p160 = scmp.lt.s32.totalorder %s17, 3
      %p161 = pnand %p159, %p160
      %p162 = pneg %p161
      // Predicated region
      $region9: #{tpu_custom_call.1} parent=5 // pred_check
        _
      $region10: #{tpu_custom_call.1} parent=5 // pred_check_branch
        %164 = sbr.rel (%p161) target = $region12
      $region11: #{tpu_custom_call.1} parent=5 // pred_region
        %s165 = ssub.s32 %s17, 1
        // Predicated region
        $region13: #{tpu_custom_call.1} parent=11 // pred_check
          %p166 = pneg %p78
        $region14: #{tpu_custom_call.1} parent=11 // pred_check_branch
          %168 = sbr.rel (%p166) target = $region16
        $region15: #{tpu_custom_call.1} parent=11 // pred_region
          %s170 = ssub.s32 2048, 2048
          %171 = vsyncadd [#allocation7], %s170
          %s172 = sshll.u32 [#allocation6], 4
          %s173 = int_to_ptr.vmem [resolvable:$true] %s172
          %178 = dma.hbm_to_vmem [thread:$0]  %s1, 2048, %s173, [#allocation7], 128, 128, 8
        $region16: #{tpu_custom_call.1} parent=11 // pred_fallthru
          _
        // Predicated region
        $region17: #{tpu_custom_call.1} parent=11 // pred_check
          %p179 = pneg %p125
        $region18: #{tpu_custom_call.1} parent=11 // pred_check_branch
          %181 = sbr.rel (%p179) target = $region20
        $region19: #{tpu_custom_call.1} parent=11 // pred_region
          %s183 = ssub.s32 64, 64
          %184 = vsyncadd [#allocation7], %s183
          %s186 = sshll.u32 [#allocation9], 4
          %s187 = int_to_ptr.vmem [resolvable:$true] %s186
          %189 = dma.hbm_to_vmem [thread:$0]  %s3, 64, %s187, [#allocation7]
        $region20: #{tpu_custom_call.1} parent=11 // pred_fallthru
          _
      $region12: #{tpu_custom_call.1} parent=5 // pred_fallthru
        _
      %p190 = scmp.lt.s32.totalorder %s17, 2
      // Predicated region
      $region21: #{tpu_custom_call.1} parent=5 // pred_check
        %p191 = pneg %p190
      $region22: #{tpu_custom_call.1} parent=5 // pred_check_branch
        %193 = sbr.rel (%p191) target = $region24
      $region23: #{tpu_custom_call.1} parent=5 // pred_region
        // Predicated region
        $region25: #{tpu_custom_call.1} parent=23 // pred_check
          %p194 = pneg %p51
        $region26: #{tpu_custom_call.1} parent=23 // pred_check_branch
          %196 = sbr.rel (%p194) target = $region28
        $region27: #{tpu_custom_call.1} parent=23 // pred_region
          %s197 = sand.u32 %s17, 1
          %s198 = scalar_lea.sflag [#allocation4], %s197
          %s199 = sand.u32 %s41, 1
          %s200 = smul.addr %s199, 8
          %s201 = scalar_lea.vmem [#allocation3], %s200
          %s203 = ssub.s32 128, 128
          %204 = vsyncadd %s198, %s203
          %s205 = sadd.s32 %s25, %s24
          %s206 = smul.addr %s205, 128
          %s207 = scalar_lea.hbm %s0, %s206
          %s209 = sshll.u32 %s201, 4
          %s210 = int_to_ptr.vmem [resolvable:$true] %s209
          %212 = dma.hbm_to_vmem [thread:$0]  %s207, 128, %s210, %s198
        $region28: #{tpu_custom_call.1} parent=23 // pred_fallthru
          _
        // Predicated region
        $region29: #{tpu_custom_call.1} parent=23 // pred_check
          %p213 = pneg %p98
        $region30: #{tpu_custom_call.1} parent=23 // pred_check_branch
          %215 = sbr.rel (%p213) target = $region32
        $region31: #{tpu_custom_call.1} parent=23 // pred_region
          %s216 = sand.u32 %s17, 1
          %s217 = scalar_lea.sflag [#allocation4], %s216
          %s218 = sand.u32 %s88, 1
          %s219 = smul.addr %s218, 8
          %s220 = scalar_lea.vmem [#allocation8], %s219
          %s222 = ssub.s32 128, 128
          %223 = vsyncadd %s217, %s222
          %s224 = smul.addr %s24, 128
          %s225 = scalar_lea.hbm %s2, %s224
          %s227 = sshll.u32 %s220, 4
          %s228 = int_to_ptr.vmem [resolvable:$true] %s227
          %230 = dma.hbm_to_vmem [thread:$0]  %s225, 128, %s228, %s217
        $region32: #{tpu_custom_call.1} parent=23 // pred_fallthru
          _
      $region24: #{tpu_custom_call.1} parent=5 // pred_fallthru
        _
      %p231 = scmp.le.s32.totalorder 1, %s17
      %p232 = scmp.lt.s32.totalorder %s17, 3
      %p233 = pnand %p231, %p232
      %p234 = pneg %p233
      // Predicated region
      $region33: #{tpu_custom_call.1} parent=5 // pred_check
        _
      $region34: #{tpu_custom_call.1} parent=5 // pred_check_branch
        %236 = sbr.rel (%p233) target = $region36
      $region35: #{tpu_custom_call.1} parent=5 // pred_region
        %s237 = ssub.s32 %s17, 1
        %s238 = sand.u32 %s22, 1
        %s239 = scalar_lea.sflag [#allocation4], %s238
        %s240 = sand.u32 %s44, 1
        %s241 = smul.addr %s240, 8
        %s242 = scalar_lea.vmem [#allocation3], %s241
        // Predicated region
        $region37: #{tpu_custom_call.1} parent=35 // pred_check
          %p243 = pneg %p57
        $region38: #{tpu_custom_call.1} parent=35 // pred_check_branch
          %245 = sbr.rel (%p243) target = $region40
        $region39: #{tpu_custom_call.1} parent=35 // pred_region
          %246 = dma.done %s239, 128
        $region40: #{tpu_custom_call.1} parent=35 // pred_fallthru
          _
        // Predicated region
        $region41: #{tpu_custom_call.1} parent=35 // pred_check
          %p247 = pneg %p78
        $region42: #{tpu_custom_call.1} parent=35 // pred_check_branch
          %249 = sbr.rel (%p247) target = $region44
        $region43: #{tpu_custom_call.1} parent=35 // pred_region
          %250 = dma.done [#allocation7], 2048
        $region44: #{tpu_custom_call.1} parent=35 // pred_fallthru
          _
        %s251 = sand.u32 %s22, 1
        %s252 = scalar_lea.sflag [#allocation4], %s251
        %s253 = sand.u32 %s91, 1
        %s254 = smul.addr %s253, 8
        %s255 = scalar_lea.vmem [#allocation8], %s254
        // Predicated region
        $region45: #{tpu_custom_call.1} parent=35 // pred_check
          %p256 = pneg %p104
        $region46: #{tpu_custom_call.1} parent=35 // pred_check_branch
          %258 = sbr.rel (%p256) target = $region48
        $region47: #{tpu_custom_call.1} parent=35 // pred_region
          %259 = dma.done %s252, 128
        $region48: #{tpu_custom_call.1} parent=35 // pred_fallthru
          _
        // Predicated region
        $region49: #{tpu_custom_call.1} parent=35 // pred_check
          %p260 = pneg %p125
        $region50: #{tpu_custom_call.1} parent=35 // pred_check_branch
          %262 = sbr.rel (%p260) target = $region52
        $region51: #{tpu_custom_call.1} parent=35 // pred_region
          %263 = dma.done [#allocation7], 64
        $region52: #{tpu_custom_call.1} parent=35 // pred_fallthru
          _
        %s264 = sand.u32 %s22, 1
        %s265 = scalar_lea.sflag [#allocation4], %s264
        %s266 = sand.u32 %s44, 1
        %s267 = smul.addr %s266, 8
        %s268 = scalar_lea.vmem [#allocation3], %s267
        %p269 = pneg %p57
        %p270 = pneg %p54
        %p271 = pneg %p78
        %p272 = pneg %p75
        %s273 = sand.u32 %s22, 1
        %s274 = scalar_lea.sflag [#allocation4], %s273
        %s275 = sand.u32 %s91, 1
        %s276 = smul.addr %s275, 8
        %s277 = scalar_lea.vmem [#allocation8], %s276
        %p278 = pneg %p104
        %p279 = pneg %p101
        %p280 = pneg %p125
        %p281 = pneg %p122
        %p282 = pneg %p151
        %p283 = pneg %p148
        %s284 = sand.u32 %s138, 1
        %s285 = scalar_lea.sflag [#allocation5], %s284
        %s286 = sand.u32 %s138, 1
        %s287 = smul.addr %s286, 8
        %s288 = scalar_lea.vmem [#allocation10], %s287
        %p289 = scmp.eq.s32.totalorder %s27, 0
        // Predicated region
        $region53: #{tpu_custom_call.1} parent=35 // pred_check
          %p290 = pneg %p289
        $region54: #{tpu_custom_call.1} parent=35 // pred_check_branch
          %292 = sbr.rel (%p290) target = $region56
        $region55: #{tpu_custom_call.1} parent=35 // pred_region
          %vm293 = vcmask 261120
          %294 = vst.msk [vmem:[#allocation2] sm:$0xff] %vm293, 0.0
        $region56: #{tpu_custom_call.1} parent=35 // pred_fallthru
          _
        %v295 = vld [vmem:[#allocation2] sm:$0xff]
        %v296 = vld [vmem:[%s242] sm:$0xff]
        %v297 = vld [vmem:[#allocation6] sm:$0xff]
        %v298 = vld [vmem:[#allocation6 + $0x8] sm:$0xff]
        %v299 = vld [vmem:[#allocation6 + $0x10] sm:$0xff]
        %v300 = vld [vmem:[#allocation6 + $0x18] sm:$0xff]
        %v301 = vld [vmem:[#allocation6 + $0x20] sm:$0xff]
        %v302 = vld [vmem:[#allocation6 + $0x28] sm:$0xff]
        %v303 = vld [vmem:[#allocation6 + $0x30] sm:$0xff]
        %v304 = vld [vmem:[#allocation6 + $0x38] sm:$0xff]
        %v305 = vld [vmem:[#allocation6 + $0x40] sm:$0xff]
        %v306 = vld [vmem:[#allocation6 + $0x48] sm:$0xff]
        %v307 = vld [vmem:[#allocation6 + $0x50] sm:$0xff]
        %v308 = vld [vmem:[#allocation6 + $0x58] sm:$0xff]
        %v309 = vld [vmem:[#allocation6 + $0x60] sm:$0xff]
        %v310 = vld [vmem:[#allocation6 + $0x68] sm:$0xff]
        %v311 = vld [vmem:[#allocation6 + $0x70] sm:$0xff]
        %v312 = vld [vmem:[#allocation6 + $0x78] sm:$0xff]
        %313 = vmatprep.subr.mxu0 0.0
        %314 = vmatpush1.msra.mxu0 %v297
        %315 = vmatprep.subr.mxu0 0.0
        %316 = vmatpush1.msra.mxu0 %v298
        %317 = vmatprep.subr.mxu0 0.0
        %318 = vmatpush1.msra.mxu0 %v299
        %319 = vmatprep.subr.mxu0 0.0
        %320 = vmatpush1.msra.mxu0 %v300
        %321 = vmatprep.subr.mxu0 0.0
        %322 = vmatpush1.msra.mxu0 %v301
        %323 = vmatprep.subr.mxu0 0.0
        %324 = vmatpush1.msra.mxu0 %v302
        %325 = vmatprep.subr.mxu0 0.0
        %326 = vmatpush1.msra.mxu0 %v303
        %327 = vmatprep.subr.mxu0 0.0
        %328 = vmatpush1.msra.mxu0 %v304
        %329 = vmatprep.subr.mxu0 0.0
        %330 = vmatpush1.msra.mxu0 %v305
        %331 = vmatprep.subr.mxu0 0.0
        %332 = vmatpush1.msra.mxu0 %v306
        %333 = vmatprep.subr.mxu0 0.0
        %334 = vmatpush1.msra.mxu0 %v307
        %335 = vmatprep.subr.mxu0 0.0
        %336 = vmatpush1.msra.mxu0 %v308
        %337 = vmatprep.subr.mxu0 0.0
        %338 = vmatpush1.msra.mxu0 %v309
        %339 = vmatprep.subr.mxu0 0.0
        %340 = vmatpush1.msra.mxu0 %v310
        %341 = vmatprep.subr.mxu0 0.0
        %342 = vmatpush1.msra.mxu0 %v311
        %343 = vmatprep.subr.mxu0 0.0
        %344 = vmatpush1.msra.mxu0 %v312
        %345 = vmatprep.subr.mxu0 0.0
        %346 = vmatpush1.msra.mxu0 0.0
        %347 = vmatprep.subr.mxu0 0.0
        %348 = vmatpush1.msra.mxu0 0.0
        %349 = vmatprep.subr.mxu0 0.0
        %350 = vmatpush1.msra.mxu0 0.0
        %351 = vmatprep.subr.mxu0 0.0
        %352 = vmatpush1.msra.mxu0 0.0
        %353 = vmatprep.subr.mxu0 0.0
        %354 = vmatpush1.msra.mxu0 0.0
        %355 = vmatprep.subr.mxu0 0.0
        %356 = vmatpush1.msra.mxu0 0.0
        %357 = vmatprep.subr.mxu0 0.0
        %358 = vmatpush1.msra.mxu0 0.0
        %359 = vmatprep.subr.mxu0 0.0
        %360 = vmatpush1.msra.mxu0 0.0
        %361 = vmatprep.subr.mxu0 0.0
        %362 = vmatpush1.msra.mxu0 0.0
        %363 = vmatprep.subr.mxu0 0.0
        %364 = vmatpush1.msra.mxu0 0.0
        %365 = vmatprep.subr.mxu0 0.0
        %366 = vmatpush1.msra.mxu0 0.0
        %367 = vmatprep.subr.mxu0 0.0
        %368 = vmatpush1.msra.mxu0 0.0
        %369 = vmatprep.subr.mxu0 0.0
        %370 = vmatpush1.msra.mxu0 0.0
        %371 = vmatprep.subr.mxu0 0.0
        %372 = vmatpush1.msra.mxu0 0.0
        %373 = vmatprep.subr.mxu0 0.0
        %374 = vmatpush1.msra.mxu0 0.0
        %375 = vmatprep.subr.mxu0 0.0
        %376 = vmatpush1.msra.mxu0 0.0
        %377 = vmatprep.mubr.f32.mxu0 0.0
        %378 = vmatmul.mubr.f32.gmra.mrb[0].mxu0 %v296
        %v379 = vpop.f32.mrb[0].mxu0
        %v380 = vadd.f32 0.0, %v379
        %v381 = vpop.f32.mrb[0].mxu0
        %382 = vdwg.mxu0
        %v383 = vadd.f32 %v295, %v380
        %vm384 = vcmask 261120
        %385 = vst.msk [vmem:[#allocation2] sm:$0xff] %vm384, %v383
        // Predicated region
        $region57: #{tpu_custom_call.1} parent=35 // pred_check
          %p386 = pneg %p289
        $region58: #{tpu_custom_call.1} parent=35 // pred_check_branch
          %388 = sbr.rel (%p386) target = $region60
        $region59: #{tpu_custom_call.1} parent=35 // pred_region
          %v389 = vld [vmem:[#allocation9] sm:$0x7]
          %v390 = vld [vmem:[#allocation2] sm:$0xff]
          %v391 = vlaneseq
          %v392 = vshrl.u32 %v391, 7
          %v393 = vsub.s32 0, %v392
          %v394 = vrot.slane %v389, %v393
          %v395 = vadd.f32 %v390, %v394
          %v396 = vld [vmem:[%s255] sm:$0xff]
          %v397 = vadd.f32 %v395, %v396
          %v398 = vsel %vm384, %v397, 0.0
          %399 = vadd.xlane.f32.xlu0 %v398
          %v400 = vpop.xlane.xlu0 %399
          %v401 = vrcp.pop 32.0
          %v402 = vmul.f32 %v400, %v401
          %v403 = vsub.f32 %v397, %v402
          %v404 = vmul.f32 %v403, %v403
          %v405 = vsel %vm384, %v404, 0.0
          %406 = vadd.xlane.f32.xlu0 %v405
          %v407 = vpop.xlane.xlu0 %406
          %v408 = vmul.f32 %v407, %v401
          %v409 = vadd.f32 %v408, 1e-12
          %v410 = vrsqrt.pop %v409
          %v411 = vmul.f32 %v403, %v410
          %v412 = vlaneseq
          %v413 = vshrl.u32 %v412, 7
          %v414 = vsub.s32 1, %v413
          %v415 = vrot.slane %v389, %v414
          %v416 = vmul.f32 %v411, %v415
          %v417 = vlaneseq
          %v418 = vshrl.u32 %v417, 7
          %v419 = vsub.s32 2, %v418
          %v420 = vrot.slane %v389, %v419
          %v421 = vadd.f32 %v416, %v420
          %422 = vst.msk [vmem:[%s288] sm:$0xff] %vm384, %v421
        $region60: #{tpu_custom_call.1} parent=35 // pred_fallthru
          _
        %s423 = sand.u32 %s138, 1
        %s424 = scalar_lea.sflag [#allocation5], %s423
        %s425 = sand.u32 %s138, 1
        %s426 = smul.addr %s425, 8
        %s427 = scalar_lea.vmem [#allocation10], %s426
        // Predicated region
        $region61: #{tpu_custom_call.1} parent=35 // pred_check
          %p428 = pneg %p148
        $region62: #{tpu_custom_call.1} parent=35 // pred_check_branch
          %430 = sbr.rel (%p428) target = $region64
        $region63: #{tpu_custom_call.1} parent=35 // pred_region
          %s432 = ssub.s32 128, 128
          %433 = vsyncadd %s424, %s432
          %s434 = smul.addr %s26, 128
          %s435 = scalar_lea.hbm %s4, %s434
          %s437 = sshll.u32 %s427, 4
          %s438 = int_to_ptr.vmem [resolvable:$true] %s437
          %440 = dma.vmem_to_hbm [thread:$0]  %s438, 128, %s435, %s424
        $region64: #{tpu_custom_call.1} parent=35 // pred_fallthru
          _
      $region36: #{tpu_custom_call.1} parent=5 // pred_fallthru
        _
      %p441 = scmp.le.s32.totalorder 2, %s17
      // Predicated region
      $region65: #{tpu_custom_call.1} parent=5 // pred_check
        %p442 = pneg %p441
      $region66: #{tpu_custom_call.1} parent=5 // pred_check_branch
        %444 = sbr.rel (%p442) target = $region68
      $region67: #{tpu_custom_call.1} parent=5 // pred_region
        %s445 = ssub.s32 %s17, 2
        // Predicated region
        $region69: #{tpu_custom_call.1} parent=67 // pred_check
          %p446 = pneg %p154
        $region70: #{tpu_custom_call.1} parent=67 // pred_check_branch
          %448 = sbr.rel (%p446) target = $region72
        $region71: #{tpu_custom_call.1} parent=67 // pred_region
          %s449 = sand.u32 %s139, 1
          %s450 = scalar_lea.sflag [#allocation5], %s449
          %s451 = sand.u32 %s139, 1
          %s452 = smul.addr %s451, 8
          %s453 = scalar_lea.vmem [#allocation10], %s452
          %454 = dma.done %s450, 128
        $region72: #{tpu_custom_call.1} parent=67 // pred_fallthru
          _
      $region68: #{tpu_custom_call.1} parent=5 // pred_fallthru
        _
    $region6: #{tpu_custom_call.1} parent=1 // loop_footer
      %s21 = sadd.s32 1, %s17
    $region7: #{tpu_custom_call.1} parent=1 // loop_footer_branch
      %16 = sbr.rel target = $region3
    $region8: #{tpu_custom_call.1} parent=1 // loop_exit
      _
    %455 = vsyncpa [#allocation4], 1
    %s456 = scalar_lea.sflag [#allocation4], 1
    %457 = vsyncpa %s456, 1
    %458 = vsyncpa [#allocation7], 1
    %459 = vsyncpa [#allocation5], 1
    %s460 = scalar_lea.sflag [#allocation5], 1
    %461 = vsyncpa %s460, 1

// kernel: tpu_custom_call.1
$region0: #{tpu_custom_call.1}
  #allocation0 [shape = 'u32[]', space=smem, size = 0x4, offset = 0x4, fixed_abs, tag = 'smem constant byte address 0x4 - core index']
  #allocation1 [shape = 'u32[144,128]{1,0:T(1,128)}', space=vmem, size = 0x12000, scoped, tag = 'internal scratch']
  #allocation2 [shape = 'f32[8,32]{1,0:T(8,128)}', space=vmem, size = 0x1000, scoped, tag = 'scratch operand']
  %s0 = inlined_call_operand.hbm [shape: f32[16,128], index: 0, kind: input, shape index: {}]
  %s1 = inlined_call_operand.hbm [shape: f32[128,32], index: 1, kind: input, shape index: {}]
  %s2 = inlined_call_operand.hbm [shape: f32[16,32], index: 2, kind: input, shape index: {}]
  %s3 = inlined_call_operand.hbm [shape: f32[3,32], index: 3, kind: input, shape index: {}]
  %s4 = inlined_call_operand.hbm [shape: f32[16,32], index: 4, kind: output, shape index: {}]
  %s5 = sld [smem:[#allocation0]]
  $region73: #{tpu_custom_call.1} parent=0
    _
  %s7 = ssub.s32 1, %s5
  %s8 = scalar_select 0, %s7, %s5
  $region1: #{tpu_custom_call.1} parent=0
    #allocation3 [shape = 'u8[8192]{0}', space=vmem, size = 0x2000, scoped, tag = 'input window, operand 0']
    #allocation4 [shape = 's32[2]{0}', space=sflag, size = 0x8, scoped, tag = 'scoped memory for tpu_custom_call.1']
    #allocation5 [shape = 's32[2]{0}', space=sflag, size = 0x8, scoped, tag = 'scoped memory for tpu_custom_call.1']
    #allocation6 [shape = 'u8[65536]{0}', space=vmem, size = 0x10000, scoped, tag = 'input window, operand 1, single buffered']
    #allocation7 [shape = 's32[1]{0}', space=sflag, size = 0x4, scoped, tag = 'scoped memory for tpu_custom_call.1']
    #allocation8 [shape = 'u8[8192]{0}', space=vmem, size = 0x2000, scoped, tag = 'input window, operand 2']
    #allocation9 [shape = 'u8[2048]{0}', space=vmem, size = 0x800, scoped, tag = 'input window, operand 3, single buffered']
    #allocation10 [shape = 'u8[8192]{0}', space=vmem, size = 0x2000, scoped, tag = 'output window, operand 0']
    %9 = vsyncpa [#allocation4], 0
    %s10 = scalar_lea.sflag [#allocation4], 1
    %11 = vsyncpa %s10, 0
    %12 = vsyncpa [#allocation7], 0
    %13 = vsyncpa [#allocation5], 0
    %s14 = scalar_lea.sflag [#allocation5], 1
    %15 = vsyncpa %s14, 0
    loop: start=0, step=1, limit=4
    $region2: #{tpu_custom_call.1} parent=1 // loop_pre_header
      _
    $region3: #{tpu_custom_call.1} parent=1 // loop_header
      %s17 = sphi 0, %s21
      %p18 = scmp.ge.s32.totalorder %s17, 4
      %s24 = sphi 0, %s36
      %s25 = sphi 0, %s32
      %s26 = sphi 0, %s24
      %s27 = sphi 0, %s25
      %s28 = sphi 0, %s26
      %s29 = sphi 0, %s27
      %s41 = sphi 0, %s43
      %s44 = sphi 0, %s41
      %s45 = sphi 0, %s44
      %s61 = sphi 0, %s45
      %s65 = sphi 0, %s65
      %s67 = sphi 0, %s65
      %s68 = sphi 0, %s67
      %s82 = sphi 0, %s68
      %s88 = sphi 0, %s90
      %s91 = sphi 0, %s88
      %s92 = sphi 0, %s91
      %s108 = sphi 0, %s92
      %s112 = sphi 0, %s112
      %s114 = sphi 0, %s112
      %s115 = sphi 0, %s114
      %s129 = sphi 0, %s115
      %s135 = sphi 0, %s137
      %s138 = sphi 0, %s135
      %s139 = sphi 0, %s138
      %s155 = sphi 0, %s139
    $region4: #{tpu_custom_call.1} parent=1 // loop_header_branch
      %20 = sbr.rel (%p18) target = $region8
    $region5: #{tpu_custom_call.1} parent=1 // loop_body
      %s22 = ssub.s32 %s17, 1
      %s23 = ssub.s32 %s17, 2
      %s30 = sadd.s32 1, %s25
      %p31 = scmp.ge.s32.totalorder %s30, 1
      %s32 = scalar_select %p31, 0, %s30
      %s33 = sadd.s32 1, %s24
      %s34 = scalar_select %p31, %s33, %s24
      %p35 = scmp.ge.s32.totalorder %s34, 2
      %s36 = scalar_select %p35, 0, %s34
      %s37 = ssub.s32 %s24, %s36
      %s38 = ssub.s32 %s25, %s32
      %s39 = sor.u32 %s37, %s38
      %p40 = scmp.eq.s32.totalorder %s39, 0
      %s42 = sadd.s32 %s41, 1
      %s43 = scalar_select %p40, %s41, %s42
      %p46 = pneg %p40
      %p47 = scmp.eq.s32.totalorder %s17, 1
      %p48 = por %p46, %p47
      %p49 = scmp.ne.s32.totalorder %s41, %s44
      %p50 = scmp.eq.s32.totalorder %s17, 0
      %p51 = por %p49, %p50
      %p52 = scmp.ne.s32.totalorder %s41, %s44
      %p53 = scmp.eq.s32.totalorder %s22, 1
      %p54 = por %p52, %p53
      %p55 = scmp.ne.s32.totalorder %s44, %s45
      %p56 = scmp.eq.s32.totalorder %s22, 0
      %p57 = por %p55, %p56
      %p58 = scmp.ne.s32.totalorder %s44, %s45
      %p59 = scmp.eq.s32.totalorder %s23, 1
      %p60 = por %p58, %p59
      %p62 = scmp.ne.s32.totalorder %s45, %s61
      %p63 = scmp.eq.s32.totalorder %s23, 0
      %p64 = por %p62, %p63
      %s66 = sadd.s32 %s65, 1
      %p69 = scmp.eq.s32.totalorder %s17, 1
      %p70 = scmp.ne.s32.totalorder %s65, %s67
      %p71 = scmp.eq.s32.totalorder %s17, 0
      %p72 = por %p70, %p71
      %p73 = scmp.ne.s32.totalorder %s65, %s67
      %p74 = scmp.eq.s32.totalorder %s22, 1
      %p75 = por %p73, %p74
      %p76 = scmp.ne.s32.totalorder %s67, %s68
      %p77 = scmp.eq.s32.totalorder %s22, 0
      %p78 = por %p76, %p77
      %p79 = scmp.ne.s32.totalorder %s67, %s68
      %p80 = scmp.eq.s32.totalorder %s23, 1
      %p81 = por %p79, %p80
      %p83 = scmp.ne.s32.totalorder %s68, %s82
      %p84 = scmp.eq.s32.totalorder %s23, 0
      %p85 = por %p83, %p84
      %s86 = ssub.s32 %s24, %s36
      %p87 = scmp.eq.s32.totalorder %s86, 0
      %s89 = sadd.s32 %s88, 1
      %s90 = scalar_select %p87, %s88, %s89
      %p93 = pneg %p87
      %p94 = scmp.eq.s32.totalorder %s17, 1
      %p95 = por %p93, %p94
      %p96 = scmp.ne.s32.totalorder %s88, %s91
      %p97 = scmp.eq.s32.totalorder %s17, 0
      %p98 = por %p96, %p97
      %p99 = scmp.ne.s32.totalorder %s88, %s91
      %p100 = scmp.eq.s32.totalorder %s22, 1
      %p101 = por %p99, %p100
      %p102 = scmp.ne.s32.totalorder %s91, %s92
      %p103 = scmp.eq.s32.totalorder %s22, 0
      %p104 = por %p102, %p103
      %p105 = scmp.ne.s32.totalorder %s91, %s92
      %p106 = scmp.eq.s32.totalorder %s23, 1
      %p107 = por %p105, %p106
      %p109 = scmp.ne.s32.totalorder %s92, %s108
      %p110 = scmp.eq.s32.totalorder %s23, 0
      %p111 = por %p109, %p110
      %s113 = sadd.s32 %s112, 1
      %p116 = scmp.eq.s32.totalorder %s17, 1
      %p117 = scmp.ne.s32.totalorder %s112, %s114
      %p118 = scmp.eq.s32.totalorder %s17, 0
      %p119 = por %p117, %p118
      %p120 = scmp.ne.s32.totalorder %s112, %s114
      %p121 = scmp.eq.s32.totalorder %s22, 1
      %p122 = por %p120, %p121
      %p123 = scmp.ne.s32.totalorder %s114, %s115
      %p124 = scmp.eq.s32.totalorder %s22, 0
      %p125 = por %p123, %p124
      %p126 = scmp.ne.s32.totalorder %s114, %s115
      %p127 = scmp.eq.s32.totalorder %s23, 1
      %p128 = por %p126, %p127
      %p130 = scmp.ne.s32.totalorder %s115, %s129
      %p131 = scmp.eq.s32.totalorder %s23, 0
      %p132 = por %p130, %p131
      %s133 = ssub.s32 %s24, %s36
      %p134 = scmp.eq.s32.totalorder %s133, 0
      %s136 = sadd.s32 %s135, 1
      %s137 = scalar_select %p134, %s135, %s136
      %p140 = pneg %p134
      %p141 = scmp.eq.s32.totalorder %s17, 1
      %p142 = por %p140, %p141
      %p143 = scmp.ne.s32.totalorder %s135, %s138
      %p144 = scmp.eq.s32.totalorder %s17, 0
      %p145 = por %p143, %p144
      %p146 = scmp.ne.s32.totalorder %s135, %s138
      %p147 = scmp.eq.s32.totalorder %s22, 1
      %p148 = por %p146, %p147
      %p149 = scmp.ne.s32.totalorder %s138, %s139
      %p150 = scmp.eq.s32.totalorder %s22, 0
      %p151 = por %p149, %p150
      %p152 = scmp.ne.s32.totalorder %s138, %s139
      %p153 = scmp.eq.s32.totalorder %s23, 1
      %p154 = por %p152, %p153
      %p156 = scmp.ne.s32.totalorder %s139, %s155
      %p157 = scmp.eq.s32.totalorder %s23, 0
      %p158 = por %p156, %p157
      %p159 = scmp.le.s32.totalorder 1, %s17
      %p160 = scmp.lt.s32.totalorder %s17, 3
      %p161 = pnand %p159, %p160
      %p162 = pneg %p161
      // Predicated region
      $region9: #{tpu_custom_call.1} parent=5 // pred_check
        _
      $region10: #{tpu_custom_call.1} parent=5 // pred_check_branch
        %164 = sbr.rel (%p161) target = $region12
      $region11: #{tpu_custom_call.1} parent=5 // pred_region
        %s165 = ssub.s32 %s17, 1
        // Predicated region
        $region13: #{tpu_custom_call.1} parent=11 // pred_check
          %p166 = pneg %p78
        $region14: #{tpu_custom_call.1} parent=11 // pred_check_branch
          %168 = sbr.rel (%p166) target = $region16
        $region15: #{tpu_custom_call.1} parent=11 // pred_region
          %s170 = ssub.s32 2048, 2048
          %171 = vsyncadd [#allocation7], %s170
          %s172 = sshll.u32 [#allocation6], 4
          %s173 = int_to_ptr.vmem [resolvable:$true] %s172
          %178 = dma.hbm_to_vmem [thread:$0]  %s1, 2048, %s173, [#allocation7], 128, 128, 8
        $region16: #{tpu_custom_call.1} parent=11 // pred_fallthru
          _
        // Predicated region
        $region17: #{tpu_custom_call.1} parent=11 // pred_check
          %p179 = pneg %p125
        $region18: #{tpu_custom_call.1} parent=11 // pred_check_branch
          %181 = sbr.rel (%p179) target = $region20
        $region19: #{tpu_custom_call.1} parent=11 // pred_region
          %s183 = ssub.s32 64, 64
          %184 = vsyncadd [#allocation7], %s183
          %s186 = sshll.u32 [#allocation9], 4
          %s187 = int_to_ptr.vmem [resolvable:$true] %s186
          %189 = dma.hbm_to_vmem [thread:$0]  %s3, 64, %s187, [#allocation7]
        $region20: #{tpu_custom_call.1} parent=11 // pred_fallthru
          _
      $region12: #{tpu_custom_call.1} parent=5 // pred_fallthru
        _
      %p190 = scmp.lt.s32.totalorder %s17, 2
      // Predicated region
      $region21: #{tpu_custom_call.1} parent=5 // pred_check
        %p191 = pneg %p190
      $region22: #{tpu_custom_call.1} parent=5 // pred_check_branch
        %193 = sbr.rel (%p191) target = $region24
      $region23: #{tpu_custom_call.1} parent=5 // pred_region
        // Predicated region
        $region25: #{tpu_custom_call.1} parent=23 // pred_check
          %p194 = pneg %p51
        $region26: #{tpu_custom_call.1} parent=23 // pred_check_branch
          %196 = sbr.rel (%p194) target = $region28
        $region27: #{tpu_custom_call.1} parent=23 // pred_region
          %s197 = sand.u32 %s17, 1
          %s198 = scalar_lea.sflag [#allocation4], %s197
          %s199 = sand.u32 %s41, 1
          %s200 = smul.addr %s199, 8
          %s201 = scalar_lea.vmem [#allocation3], %s200
          %s203 = ssub.s32 128, 128
          %204 = vsyncadd %s198, %s203
          %s205 = sadd.s32 %s25, %s24
          %s206 = smul.addr %s205, 128
          %s207 = scalar_lea.hbm %s0, %s206
          %s209 = sshll.u32 %s201, 4
          %s210 = int_to_ptr.vmem [resolvable:$true] %s209
          %212 = dma.hbm_to_vmem [thread:$0]  %s207, 128, %s210, %s198
        $region28: #{tpu_custom_call.1} parent=23 // pred_fallthru
          _
        // Predicated region
        $region29: #{tpu_custom_call.1} parent=23 // pred_check
          %p213 = pneg %p98
        $region30: #{tpu_custom_call.1} parent=23 // pred_check_branch
          %215 = sbr.rel (%p213) target = $region32
        $region31: #{tpu_custom_call.1} parent=23 // pred_region
          %s216 = sand.u32 %s17, 1
          %s217 = scalar_lea.sflag [#allocation4], %s216
          %s218 = sand.u32 %s88, 1
          %s219 = smul.addr %s218, 8
          %s220 = scalar_lea.vmem [#allocation8], %s219
          %s222 = ssub.s32 128, 128
          %223 = vsyncadd %s217, %s222
          %s224 = smul.addr %s24, 128
          %s225 = scalar_lea.hbm %s2, %s224
          %s227 = sshll.u32 %s220, 4
          %s228 = int_to_ptr.vmem [resolvable:$true] %s227
          %230 = dma.hbm_to_vmem [thread:$0]  %s225, 128, %s228, %s217
        $region32: #{tpu_custom_call.1} parent=23 // pred_fallthru
          _
      $region24: #{tpu_custom_call.1} parent=5 // pred_fallthru
        _
      %p231 = scmp.le.s32.totalorder 1, %s17
      %p232 = scmp.lt.s32.totalorder %s17, 3
      %p233 = pnand %p231, %p232
      %p234 = pneg %p233
      // Predicated region
      $region33: #{tpu_custom_call.1} parent=5 // pred_check
        _
      $region34: #{tpu_custom_call.1} parent=5 // pred_check_branch
        %236 = sbr.rel (%p233) target = $region36
      $region35: #{tpu_custom_call.1} parent=5 // pred_region
        %s237 = ssub.s32 %s17, 1
        %s238 = sand.u32 %s22, 1
        %s239 = scalar_lea.sflag [#allocation4], %s238
        %s240 = sand.u32 %s44, 1
        %s241 = smul.addr %s240, 8
        %s242 = scalar_lea.vmem [#allocation3], %s241
        // Predicated region
        $region37: #{tpu_custom_call.1} parent=35 // pred_check
          %p243 = pneg %p57
        $region38: #{tpu_custom_call.1} parent=35 // pred_check_branch
          %245 = sbr.rel (%p243) target = $region40
        $region39: #{tpu_custom_call.1} parent=35 // pred_region
          %246 = dma.done %s239, 128
        $region40: #{tpu_custom_call.1} parent=35 // pred_fallthru
          _
        // Predicated region
        $region41: #{tpu_custom_call.1} parent=35 // pred_check
          %p247 = pneg %p78
        $region42: #{tpu_custom_call.1} parent=35 // pred_check_branch
          %249 = sbr.rel (%p247) target = $region44
        $region43: #{tpu_custom_call.1} parent=35 // pred_region
          %250 = dma.done [#allocation7], 2048
        $region44: #{tpu_custom_call.1} parent=35 // pred_fallthru
          _
        %s251 = sand.u32 %s22, 1
        %s252 = scalar_lea.sflag [#allocation4], %s251
        %s253 = sand.u32 %s91, 1
        %s254 = smul.addr %s253, 8
        %s255 = scalar_lea.vmem [#allocation8], %s254
        // Predicated region
        $region45: #{tpu_custom_call.1} parent=35 // pred_check
          %p256 = pneg %p104
        $region46: #{tpu_custom_call.1} parent=35 // pred_check_branch
          %258 = sbr.rel (%p256) target = $region48
        $region47: #{tpu_custom_call.1} parent=35 // pred_region
          %259 = dma.done %s252, 128
        $region48: #{tpu_custom_call.1} parent=35 // pred_fallthru
          _
        // Predicated region
        $region49: #{tpu_custom_call.1} parent=35 // pred_check
          %p260 = pneg %p125
        $region50: #{tpu_custom_call.1} parent=35 // pred_check_branch
          %262 = sbr.rel (%p260) target = $region52
        $region51: #{tpu_custom_call.1} parent=35 // pred_region
          %263 = dma.done [#allocation7], 64
        $region52: #{tpu_custom_call.1} parent=35 // pred_fallthru
          _
        %s264 = sand.u32 %s22, 1
        %s265 = scalar_lea.sflag [#allocation4], %s264
        %s266 = sand.u32 %s44, 1
        %s267 = smul.addr %s266, 8
        %s268 = scalar_lea.vmem [#allocation3], %s267
        %p269 = pneg %p57
        %p270 = pneg %p54
        %p271 = pneg %p78
        %p272 = pneg %p75
        %s273 = sand.u32 %s22, 1
        %s274 = scalar_lea.sflag [#allocation4], %s273
        %s275 = sand.u32 %s91, 1
        %s276 = smul.addr %s275, 8
        %s277 = scalar_lea.vmem [#allocation8], %s276
        %p278 = pneg %p104
        %p279 = pneg %p101
        %p280 = pneg %p125
        %p281 = pneg %p122
        %p282 = pneg %p151
        %p283 = pneg %p148
        %s284 = sand.u32 %s138, 1
        %s285 = scalar_lea.sflag [#allocation5], %s284
        %s286 = sand.u32 %s138, 1
        %s287 = smul.addr %s286, 8
        %s288 = scalar_lea.vmem [#allocation10], %s287
        %p289 = scmp.eq.s32.totalorder %s27, 0
        // Predicated region
        $region53: #{tpu_custom_call.1} parent=35 // pred_check
          %p290 = pneg %p289
        $region54: #{tpu_custom_call.1} parent=35 // pred_check_branch
          %292 = sbr.rel (%p290) target = $region56
        $region55: #{tpu_custom_call.1} parent=35 // pred_region
          %vm293 = vcmask 261120
          %294 = vst.msk [vmem:[#allocation2] sm:$0xff] %vm293, 0.0
        $region56: #{tpu_custom_call.1} parent=35 // pred_fallthru
          _
        %v295 = vld [vmem:[#allocation2] sm:$0xff]
        %v296 = vld [vmem:[%s242] sm:$0xff]
        %v297 = vld [vmem:[#allocation6] sm:$0xff]
        %v298 = vld [vmem:[#allocation6 + $0x8] sm:$0xff]
        %v299 = vld [vmem:[#allocation6 + $0x10] sm:$0xff]
        %v300 = vld [vmem:[#allocation6 + $0x18] sm:$0xff]
        %v301 = vld [vmem:[#allocation6 + $0x20] sm:$0xff]
        %v302 = vld [vmem:[#allocation6 + $0x28] sm:$0xff]
        %v303 = vld [vmem:[#allocation6 + $0x30] sm:$0xff]
        %v304 = vld [vmem:[#allocation6 + $0x38] sm:$0xff]
        %v305 = vld [vmem:[#allocation6 + $0x40] sm:$0xff]
        %v306 = vld [vmem:[#allocation6 + $0x48] sm:$0xff]
        %v307 = vld [vmem:[#allocation6 + $0x50] sm:$0xff]
        %v308 = vld [vmem:[#allocation6 + $0x58] sm:$0xff]
        %v309 = vld [vmem:[#allocation6 + $0x60] sm:$0xff]
        %v310 = vld [vmem:[#allocation6 + $0x68] sm:$0xff]
        %v311 = vld [vmem:[#allocation6 + $0x70] sm:$0xff]
        %v312 = vld [vmem:[#allocation6 + $0x78] sm:$0xff]
        %313 = vmatprep.subr.mxu0 0.0
        %314 = vmatpush1.msra.mxu0 %v297
        %315 = vmatprep.subr.mxu0 0.0
        %316 = vmatpush1.msra.mxu0 %v298
        %317 = vmatprep.subr.mxu0 0.0
        %318 = vmatpush1.msra.mxu0 %v299
        %319 = vmatprep.subr.mxu0 0.0
        %320 = vmatpush1.msra.mxu0 %v300
        %321 = vmatprep.subr.mxu0 0.0
        %322 = vmatpush1.msra.mxu0 %v301
        %323 = vmatprep.subr.mxu0 0.0
        %324 = vmatpush1.msra.mxu0 %v302
        %325 = vmatprep.subr.mxu0 0.0
        %326 = vmatpush1.msra.mxu0 %v303
        %327 = vmatprep.subr.mxu0 0.0
        %328 = vmatpush1.msra.mxu0 %v304
        %329 = vmatprep.subr.mxu0 0.0
        %330 = vmatpush1.msra.mxu0 %v305
        %331 = vmatprep.subr.mxu0 0.0
        %332 = vmatpush1.msra.mxu0 %v306
        %333 = vmatprep.subr.mxu0 0.0
        %334 = vmatpush1.msra.mxu0 %v307
        %335 = vmatprep.subr.mxu0 0.0
        %336 = vmatpush1.msra.mxu0 %v308
        %337 = vmatprep.subr.mxu0 0.0
        %338 = vmatpush1.msra.mxu0 %v309
        %339 = vmatprep.subr.mxu0 0.0
        %340 = vmatpush1.msra.mxu0 %v310
        %341 = vmatprep.subr.mxu0 0.0
        %342 = vmatpush1.msra.mxu0 %v311
        %343 = vmatprep.subr.mxu0 0.0
        %344 = vmatpush1.msra.mxu0 %v312
        %345 = vmatprep.subr.mxu0 0.0
        %346 = vmatpush1.msra.mxu0 0.0
        %347 = vmatprep.subr.mxu0 0.0
        %348 = vmatpush1.msra.mxu0 0.0
        %349 = vmatprep.subr.mxu0 0.0
        %350 = vmatpush1.msra.mxu0 0.0
        %351 = vmatprep.subr.mxu0 0.0
        %352 = vmatpush1.msra.mxu0 0.0
        %353 = vmatprep.subr.mxu0 0.0
        %354 = vmatpush1.msra.mxu0 0.0
        %355 = vmatprep.subr.mxu0 0.0
        %356 = vmatpush1.msra.mxu0 0.0
        %357 = vmatprep.subr.mxu0 0.0
        %358 = vmatpush1.msra.mxu0 0.0
        %359 = vmatprep.subr.mxu0 0.0
        %360 = vmatpush1.msra.mxu0 0.0
        %361 = vmatprep.subr.mxu0 0.0
        %362 = vmatpush1.msra.mxu0 0.0
        %363 = vmatprep.subr.mxu0 0.0
        %364 = vmatpush1.msra.mxu0 0.0
        %365 = vmatprep.subr.mxu0 0.0
        %366 = vmatpush1.msra.mxu0 0.0
        %367 = vmatprep.subr.mxu0 0.0
        %368 = vmatpush1.msra.mxu0 0.0
        %369 = vmatprep.subr.mxu0 0.0
        %370 = vmatpush1.msra.mxu0 0.0
        %371 = vmatprep.subr.mxu0 0.0
        %372 = vmatpush1.msra.mxu0 0.0
        %373 = vmatprep.subr.mxu0 0.0
        %374 = vmatpush1.msra.mxu0 0.0
        %375 = vmatprep.subr.mxu0 0.0
        %376 = vmatpush1.msra.mxu0 0.0
        %377 = vmatprep.mubr.f32.mxu0 0.0
        %378 = vmatmul.mubr.f32.gmra.mrb[0].mxu0 %v296
        %v379 = vpop.f32.mrb[0].mxu0
        %v380 = vadd.f32 0.0, %v379
        %v381 = vpop.f32.mrb[0].mxu0
        %382 = vdwg.mxu0
        %v383 = vadd.f32 %v295, %v380
        %vm384 = vcmask 261120
        %385 = vst.msk [vmem:[#allocation2] sm:$0xff] %vm384, %v383
        // Predicated region
        $region57: #{tpu_custom_call.1} parent=35 // pred_check
          %p386 = pneg %p289
        $region58: #{tpu_custom_call.1} parent=35 // pred_check_branch
          %388 = sbr.rel (%p386) target = $region60
        $region59: #{tpu_custom_call.1} parent=35 // pred_region
          %v389 = vld [vmem:[#allocation9] sm:$0x7]
          %v390 = vld [vmem:[#allocation2] sm:$0xff]
          %v391 = vlaneseq
          %v392 = vshrl.u32 %v391, 7
          %v393 = vsub.s32 0, %v392
          %v394 = vrot.slane %v389, %v393
          %v395 = vadd.f32 %v390, %v394
          %v396 = vld [vmem:[%s255] sm:$0xff]
          %v397 = vadd.f32 %v395, %v396
          %v398 = vsel %vm384, %v397, 0.0
          %399 = vadd.xlane.f32.xlu0 %v398
          %v400 = vpop.xlane.xlu0 %399
          %v401 = vrcp.pop 32.0
          %v402 = vmul.f32 %v400, %v401
          %v403 = vsub.f32 %v397, %v402
          %v404 = vmul.f32 %v403, %v403
          %v405 = vsel %vm384, %v404, 0.0
          %406 = vadd.xlane.f32.xlu0 %v405
          %v407 = vpop.xlane.xlu0 %406
          %v408 = vmul.f32 %v407, %v401
          %v409 = vadd.f32 %v408, 1e-12
          %v410 = vrsqrt.pop %v409
          %v411 = vmul.f32 %v403, %v410
          %v412 = vlaneseq
          %v413 = vshrl.u32 %v412, 7
          %v414 = vsub.s32 1, %v413
          %v415 = vrot.slane %v389, %v414
          %v416 = vmul.f32 %v411, %v415
          %v417 = vlaneseq
          %v418 = vshrl.u32 %v417, 7
          %v419 = vsub.s32 2, %v418
          %v420 = vrot.slane %v389, %v419
          %v421 = vadd.f32 %v416, %v420
          %422 = vst.msk [vmem:[%s288] sm:$0xff] %vm384, %v421
        $region60: #{tpu_custom_call.1} parent=35 // pred_fallthru
          _
        %s423 = sand.u32 %s138, 1
        %s424 = scalar_lea.sflag [#allocation5], %s423
        %s425 = sand.u32 %s138, 1
        %s426 = smul.addr %s425, 8
        %s427 = scalar_lea.vmem [#allocation10], %s426
        // Predicated region
        $region61: #{tpu_custom_call.1} parent=35 // pred_check
          %p428 = pneg %p148
        $region62: #{tpu_custom_call.1} parent=35 // pred_check_branch
          %430 = sbr.rel (%p428) target = $region64
        $region63: #{tpu_custom_call.1} parent=35 // pred_region
          %s432 = ssub.s32 128, 128
          %433 = vsyncadd %s424, %s432
          %s434 = smul.addr %s26, 128
          %s435 = scalar_lea.hbm %s4, %s434
          %s437 = sshll.u32 %s427, 4
          %s438 = int_to_ptr.vmem [resolvable:$true] %s437
          %440 = dma.vmem_to_hbm [thread:$0]  %s438, 128, %s435, %s424
        $region64: #{tpu_custom_call.1} parent=35 // pred_fallthru
          _
      $region36: #{tpu_custom_call.1} parent=5 // pred_fallthru
        _
      %p441 = scmp.le.s32.totalorder 2, %s17
      // Predicated region
      $region65: #{tpu_custom_call.1} parent=5 // pred_check
        %p442 = pneg %p441
      $region66: #{tpu_custom_call.1} parent=5 // pred_check_branch
        %444 = sbr.rel (%p442) target = $region68
      $region67: #{tpu_custom_call.1} parent=5 // pred_region
        %s445 = ssub.s32 %s17, 2
        // Predicated region
        $region69: #{tpu_custom_call.1} parent=67 // pred_check
          %p446 = pneg %p154
        $region70: #{tpu_custom_call.1} parent=67 // pred_check_branch
          %448 = sbr.rel (%p446) target = $region72
        $region71: #{tpu_custom_call.1} parent=67 // pred_region
          %s449 = sand.u32 %s139, 1
          %s450 = scalar_lea.sflag [#allocation5], %s449
          %s451 = sand.u32 %s139, 1
          %s452 = smul.addr %s451, 8
          %s453 = scalar_lea.vmem [#allocation10], %s452
          %454 = dma.done %s450, 128
        $region72: #{tpu_custom_call.1} parent=67 // pred_fallthru
          _
      $region68: #{tpu_custom_call.1} parent=5 // pred_fallthru
        _
    $region6: #{tpu_custom_call.1} parent=1 // loop_footer
      %s21 = sadd.s32 1, %s17
    $region7: #{tpu_custom_call.1} parent=1 // loop_footer_branch
      %16 = sbr.rel target = $region3
    $region8: #{tpu_custom_call.1} parent=1 // loop_exit
      _
    %455 = vsyncpa [#allocation4], 1
    %s456 = scalar_lea.sflag [#allocation4], 1
    %457 = vsyncpa %s456, 1
    %458 = vsyncpa [#allocation7], 1
    %459 = vsyncpa [#allocation5], 1
    %s460 = scalar_lea.sflag [#allocation5], 1
    %461 = vsyncpa %s460, 1

</llo_original>
